<compile_context>
chip_gen: v7x
topology: tpu7x:2x2x1
jax: 0.10.0
libtpu: 0.0.40
codegen_flags: <defaults>
</compile_context>

<pallas_src>
import functools

import jax
import jax.numpy as jnp
from jax.experimental import pallas as pl
from jax.experimental.pallas import tpu as pltpu

LANE = 128     # vreg lane width (last dim)
SUBLANE = 8    # vreg sublane count (second-to-last dim)


def _round_up(n, m):
    return ((n + m - 1) // m) * m


# ---------------------------------------------------------------------------
# Fused Pallas kernel: trunk -> (adj branch, node branch), all in one call.
# refs layout: x, (w0, b0), (w1, b1), ..., adj_out, node_out
# Layer order:  trunk hidden layers, adj hidden layers, adj final,
#               node hidden layers, node final.
# ---------------------------------------------------------------------------
def _fused_decoder_kernel(*refs, n_trunk, n_adj, n_node):
    n_lin = n_trunk + n_adj + 1 + n_node + 1
    x_ref = refs[0]
    wb_refs = refs[1:1 + 2 * n_lin]
    adj_out_ref, node_out_ref = refs[1 + 2 * n_lin:1 + 2 * n_lin + 2]

    def apply_layer(h, layer_idx, relu):
        w = wb_refs[2 * layer_idx][...]          # (In_p, Out_p), lane-dense
        b = wb_refs[2 * layer_idx + 1][...]      # (1, Out_p)
        y = jnp.dot(h, w, preferred_element_type=jnp.float32) + b
        if relu:
            y = jnp.maximum(y, 0.0)
        return y

    h = x_ref[...]
    li = 0
    # shared trunk (FCLayer = Linear + ReLU)
    for _ in range(n_trunk):
        h = apply_layer(h, li, relu=True)
        li += 1
    # adjacency branch
    adj = h
    for _ in range(n_adj):
        adj = apply_layer(adj, li, relu=True)
        li += 1
    adj = apply_layer(adj, li, relu=False)       # final adj projection
    li += 1
    # node branch
    nodes = h
    for _ in range(n_node):
        nodes = apply_layer(nodes, li, relu=True)
        li += 1
    nodes = apply_layer(nodes, li, relu=False)   # final node projection
    li += 1

    adj_out_ref[...] = adj.astype(adj_out_ref.dtype)
    node_out_ref[...] = nodes.astype(node_out_ref.dtype)


# ---------------------------------------------------------------------------
# Parameter construction (deterministic, nn.Linear-style uniform init)
# ---------------------------------------------------------------------------
def _init_linear(key, in_dim, out_dim):
    kw, kb = jax.random.split(key)
    bound = 1.0 / jnp.sqrt(jnp.float32(in_dim))
    w = jax.random.uniform(kw, (in_dim, out_dim), jnp.float32, -bound, bound)
    b = jax.random.uniform(kb, (out_dim,), jnp.float32, -bound, bound)
    return w, b


def make_decoder_params(key, z_dim, atom_dim, max_vertex, nedges, config):
    params = {"layers": [], "adj_layers": [], "node_layers": []}
    keys = iter(jax.random.split(key, 64))

    in_dim = z_dim
    for conf in config["layers"]:
        params["layers"].append(_init_linear(next(keys), in_dim, conf["out_size"]))
        in_dim = conf["out_size"]
    shared_dim = in_dim

    adj_in = shared_dim
    for gconf in config["graph_layers"]:
        params["adj_layers"].append(_init_linear(next(keys), adj_in, gconf["out_size"]))
        adj_in = gconf["out_size"]
    nnodes = max_vertex * (max_vertex - 1) // 2
    params["adj_final"] = _init_linear(next(keys), adj_in, nnodes * nedges)

    node_in = shared_dim
    for nconf in config["node_layers"]:
        params["node_layers"].append(_init_linear(next(keys), node_in, nconf["out_size"]))
        node_in = nconf["out_size"]
    params["node_final"] = _init_linear(next(keys), node_in, max_vertex * atom_dim)

    return params


# ---------------------------------------------------------------------------
# Padding helpers (zero-padded rows/cols keep the math exact: padded input
# lanes are zero, padded bias lanes are zero, ReLU(0)=0, so padding never
# leaks into real output columns).
# ---------------------------------------------------------------------------
def _pad_weight(w, in_p, out_p):
    In, Out = w.shape
    return jnp.pad(w.astype(jnp.float32), ((0, in_p - In), (0, out_p - Out)))


def _pad_bias(b, out_p):
    (Out,) = b.shape
    return jnp.pad(b.astype(jnp.float32), (0, out_p - Out)).reshape(1, out_p)


# ---------------------------------------------------------------------------
# Decoder forward (single fused pallas_call)
# ---------------------------------------------------------------------------
def decoder_forward(x, params, *, atom_dim, max_vertex, nedges):
    B, z_dim = x.shape
    nnodes = max_vertex * (max_vertex - 1) // 2
    adj_out_dim = nnodes * nedges
    node_out_dim = max_vertex * atom_dim

    linears = (list(params["layers"])
               + list(params["adj_layers"]) + [params["adj_final"]]
               + list(params["node_layers"]) + [params["node_final"]])
    n_trunk = len(params["layers"])
    n_adj = len(params["adj_layers"])
    n_node = len(params["node_layers"])

    # Pad batch to a full sublane group and features to lane-dense widths.
    Bp = _round_up(max(B, SUBLANE), SUBLANE)
    zp = _round_up(z_dim, LANE)
    x_p = jnp.pad(x.astype(jnp.float32), ((0, Bp - B), (0, zp - z_dim)))

    operands = [x_p]
    flops = 0
    for (w, b) in linears:
        In, Out = w.shape
        in_p, out_p = _round_up(In, LANE), _round_up(Out, LANE)
        operands.append(_pad_weight(w, in_p, out_p))
        operands.append(_pad_bias(b, out_p))
        flops += 2 * Bp * in_p * out_p

    adj_out_p = _round_up(adj_out_dim, LANE)
    node_out_p = _round_up(node_out_dim, LANE)

    # Full-extent single blocks: entire (tiny, <100 KB) model is VMEM-resident.
    in_specs = [pl.BlockSpec(op.shape, lambda: (0, 0)) for op in operands]
    out_shapes = (jax.ShapeDtypeStruct((Bp, adj_out_p), jnp.float32),
                  jax.ShapeDtypeStruct((Bp, node_out_p), jnp.float32))
    out_specs = (pl.BlockSpec((Bp, adj_out_p), lambda: (0, 0)),
                 pl.BlockSpec((Bp, node_out_p), lambda: (0, 0)))

    bytes_accessed = int(sum(op.size * op.dtype.itemsize for op in operands)
                         + 4 * Bp * (adj_out_p + node_out_p))
    cost = pl.CostEstimate(flops=int(flops), transcendentals=0,
                           bytes_accessed=bytes_accessed)

    adj_p, nodes_p = pl.pallas_call(
        functools.partial(_fused_decoder_kernel,
                          n_trunk=n_trunk, n_adj=n_adj, n_node=n_node),
        out_shape=out_shapes,
        in_specs=in_specs,
        out_specs=out_specs,
        cost_estimate=cost,
        compiler_params=pltpu.CompilerParams(vmem_limit_bytes=64 * 1024 * 1024),
    )(*operands)

    # Strip padding only at the very end, in the JAX wrapper.
    adj_logits = adj_p[:B, :adj_out_dim].reshape(B, -1, nedges)
    nodes_logits = nodes_p[:B, :node_out_dim].reshape(B, max_vertex, atom_dim)
    return adj_logits, nodes_logits


# ---------------------------------------------------------------------------
# Main
# ---------------------------------------------------------------------------
if __name__ == "__main__":
    z_dim = 32
    atom_dim = 4
    max_vertex = 8
    nedges = 2
    config = {
        "layers": [{"out_size": 64}],
        "graph_layers": [{"out_size": 64}],
        "node_layers": [{"out_size": 64}],
    }

    key = jax.random.PRNGKey(0)
    kx, kp = jax.random.split(key)

    B = 2
    x = jax.random.normal(kx, (B, z_dim), jnp.float32)
    params = make_decoder_params(kp, z_dim, atom_dim, max_vertex, nedges, config)

    adj_logits, nodes_logits = decoder_forward(
        x, params, atom_dim=atom_dim, max_vertex=max_vertex, nedges=nedges
    )
    jax.block_until_ready((adj_logits, nodes_logits))

    nnodes = max_vertex * (max_vertex - 1) // 2
    assert adj_logits.shape == (B, nnodes, nedges)
    assert nodes_logits.shape == (B, max_vertex, atom_dim)

    # reference check in plain JAX (unpadded weights)
    def ref_forward(x):
        out = x
        for w, b in params["layers"]:
            out = jnp.maximum(out @ w + b, 0.0)
        adj = out
        for w, b in params["adj_layers"]:
            adj = jnp.maximum(adj @ w + b, 0.0)
        w, b = params["adj_final"]
        adj = (adj @ w + b).reshape(B, -1, nedges)
        nodes = out
        for w, b in params["node_layers"]:
            nodes = jnp.maximum(nodes @ w + b, 0.0)
        w, b = params["node_final"]
        nodes = (nodes @ w + b).reshape(B, max_vertex, atom_dim)
        return adj, nodes

    ref_adj, ref_nodes = ref_forward(x)
    assert jnp.allclose(adj_logits, ref_adj, atol=1e-5)
    assert jnp.allclose(nodes_logits, ref_nodes, atol=1e-5)

    print("KERNEL_OK")
</pallas_src>

<mosaic_0001>
module attributes {stable_mosaic.version = 11 : i64} {
  func.func @_fused_decoder_kernel(%arg0: memref<8x128xf32, #tpu.memory_space<vmem>>, %arg1: memref<128x128xf32, #tpu.memory_space<vmem>>, %arg2: memref<1x128xf32, #tpu.memory_space<vmem>>, %arg3: memref<128x128xf32, #tpu.memory_space<vmem>>, %arg4: memref<1x128xf32, #tpu.memory_space<vmem>>, %arg5: memref<128x128xf32, #tpu.memory_space<vmem>>, %arg6: memref<1x128xf32, #tpu.memory_space<vmem>>, %arg7: memref<128x128xf32, #tpu.memory_space<vmem>>, %arg8: memref<1x128xf32, #tpu.memory_space<vmem>>, %arg9: memref<128x128xf32, #tpu.memory_space<vmem>>, %arg10: memref<1x128xf32, #tpu.memory_space<vmem>>, %arg11: memref<8x128xf32, #tpu.memory_space<vmem>>, %arg12: memref<8x128xf32, #tpu.memory_space<vmem>>) attributes {dimension_semantics = [], scalar_prefetch = 0 : i64, scratch_operands = 0 : i64, tpu.core_type = #tpu.core_type<tc>} {
    %c0 = arith.constant 0 : index
    %c0_0 = arith.constant 0 : index
    %0 = vector.load %arg0[%c0, %c0_0] : memref<8x128xf32, #tpu.memory_space<vmem>>, vector<8x128xf32>
    %c0_1 = arith.constant 0 : index
    %c0_2 = arith.constant 0 : index
    %1 = vector.load %arg1[%c0_1, %c0_2] : memref<128x128xf32, #tpu.memory_space<vmem>>, vector<128x128xf32>
    %c0_3 = arith.constant 0 : index
    %c0_4 = arith.constant 0 : index
    %2 = vector.load %arg2[%c0_3, %c0_4] : memref<1x128xf32, #tpu.memory_space<vmem>>, vector<1x128xf32>
    %cst = arith.constant dense<0.000000e+00> : vector<8x128xf32>
    %3 = tpu.matmul %0, %1, %cst {dimension_numbers = #tpu.dot_dimension_numbers<[1], [0], [0], [1], [0, 0, 1, 1], [], []>} : vector<8x128xf32>, vector<128x128xf32>, vector<8x128xf32> -> vector<8x128xf32>
    %4 = vector.broadcast %2 : vector<1x128xf32> to vector<8x128xf32>
    %5 = arith.addf %3, %4 : vector<8x128xf32>
    %cst_5 = arith.constant 0.000000e+00 : f32
    %6 = vector.broadcast %cst_5 : f32 to vector<8x128xf32>
    %7 = arith.maximumf %5, %6 : vector<8x128xf32>
    %c0_6 = arith.constant 0 : index
    %c0_7 = arith.constant 0 : index
    %8 = vector.load %arg3[%c0_6, %c0_7] : memref<128x128xf32, #tpu.memory_space<vmem>>, vector<128x128xf32>
    %c0_8 = arith.constant 0 : index
    %c0_9 = arith.constant 0 : index
    %9 = vector.load %arg4[%c0_8, %c0_9] : memref<1x128xf32, #tpu.memory_space<vmem>>, vector<1x128xf32>
    %cst_10 = arith.constant dense<0.000000e+00> : vector<8x128xf32>
    %10 = tpu.matmul %7, %8, %cst_10 {dimension_numbers = #tpu.dot_dimension_numbers<[1], [0], [0], [1], [0, 0, 1, 1], [], []>} : vector<8x128xf32>, vector<128x128xf32>, vector<8x128xf32> -> vector<8x128xf32>
    %11 = vector.broadcast %9 : vector<1x128xf32> to vector<8x128xf32>
    %12 = arith.addf %10, %11 : vector<8x128xf32>
    %cst_11 = arith.constant 0.000000e+00 : f32
    %13 = vector.broadcast %cst_11 : f32 to vector<8x128xf32>
    %14 = arith.maximumf %12, %13 : vector<8x128xf32>
    %c0_12 = arith.constant 0 : index
    %c0_13 = arith.constant 0 : index
    %15 = vector.load %arg5[%c0_12, %c0_13] : memref<128x128xf32, #tpu.memory_space<vmem>>, vector<128x128xf32>
    %c0_14 = arith.constant 0 : index
    %c0_15 = arith.constant 0 : index
    %16 = vector.load %arg6[%c0_14, %c0_15] : memref<1x128xf32, #tpu.memory_space<vmem>>, vector<1x128xf32>
    %cst_16 = arith.constant dense<0.000000e+00> : vector<8x128xf32>
    %17 = tpu.matmul %14, %15, %cst_16 {dimension_numbers = #tpu.dot_dimension_numbers<[1], [0], [0], [1], [0, 0, 1, 1], [], []>} : vector<8x128xf32>, vector<128x128xf32>, vector<8x128xf32> -> vector<8x128xf32>
    %18 = vector.broadcast %16 : vector<1x128xf32> to vector<8x128xf32>
    %19 = arith.addf %17, %18 : vector<8x128xf32>
    %c0_17 = arith.constant 0 : index
    %c0_18 = arith.constant 0 : index
    %20 = vector.load %arg7[%c0_17, %c0_18] : memref<128x128xf32, #tpu.memory_space<vmem>>, vector<128x128xf32>
    %c0_19 = arith.constant 0 : index
    %c0_20 = arith.constant 0 : index
    %21 = vector.load %arg8[%c0_19, %c0_20] : memref<1x128xf32, #tpu.memory_space<vmem>>, vector<1x128xf32>
    %cst_21 = arith.constant dense<0.000000e+00> : vector<8x128xf32>
    %22 = tpu.matmul %7, %20, %cst_21 {dimension_numbers = #tpu.dot_dimension_numbers<[1], [0], [0], [1], [0, 0, 1, 1], [], []>} : vector<8x128xf32>, vector<128x128xf32>, vector<8x128xf32> -> vector<8x128xf32>
    %23 = vector.broadcast %21 : vector<1x128xf32> to vector<8x128xf32>
    %24 = arith.addf %22, %23 : vector<8x128xf32>
    %cst_22 = arith.constant 0.000000e+00 : f32
    %25 = vector.broadcast %cst_22 : f32 to vector<8x128xf32>
    %26 = arith.maximumf %24, %25 : vector<8x128xf32>
    %c0_23 = arith.constant 0 : index
    %c0_24 = arith.constant 0 : index
    %27 = vector.load %arg9[%c0_23, %c0_24] : memref<128x128xf32, #tpu.memory_space<vmem>>, vector<128x128xf32>
    %c0_25 = arith.constant 0 : index
    %c0_26 = arith.constant 0 : index
    %28 = vector.load %arg10[%c0_25, %c0_26] : memref<1x128xf32, #tpu.memory_space<vmem>>, vector<1x128xf32>
    %cst_27 = arith.constant dense<0.000000e+00> : vector<8x128xf32>
    %29 = tpu.matmul %26, %27, %cst_27 {dimension_numbers = #tpu.dot_dimension_numbers<[1], [0], [0], [1], [0, 0, 1, 1], [], []>} : vector<8x128xf32>, vector<128x128xf32>, vector<8x128xf32> -> vector<8x128xf32>
    %30 = vector.broadcast %28 : vector<1x128xf32> to vector<8x128xf32>
    %31 = arith.addf %29, %30 : vector<8x128xf32>
    %c0_28 = arith.constant 0 : index
    %c0_29 = arith.constant 0 : index
    %32 = vector.load %arg11[%c0_28, %c0_29] : memref<8x128xf32, #tpu.memory_space<vmem>>, vector<8x128xf32>
    tpu.vector_store %arg11[%c0_28, %c0_29], %19 {strides = array<i32>} : memref<8x128xf32, #tpu.memory_space<vmem>>, vector<8x128xf32>,
    %c0_30 = arith.constant 0 : index
    %c0_31 = arith.constant 0 : index
    %33 = vector.load %arg12[%c0_30, %c0_31] : memref<8x128xf32, #tpu.memory_space<vmem>>, vector<8x128xf32>
    tpu.vector_store %arg12[%c0_30, %c0_31], %31 {strides = array<i32>} : memref<8x128xf32, #tpu.memory_space<vmem>>, vector<8x128xf32>,
    return
  }
}

</mosaic_0001>

<llo_original>
// kernel: tpu_custom_call.1
$region0: #{tpu_custom_call.1}
  #allocation0 [shape = 'u32[]', space=smem, size = 0x4, offset = 0x4, fixed_abs, tag = 'smem constant byte address 0x4 - core index']
  #allocation1 [shape = 'u32[144,128]{1,0:T(1,128)}', space=vmem, size = 0x12000, scoped, tag = 'internal scratch']
  %s0 = inlined_call_operand.hbm [shape: f32[8,128], index: 0, kind: input, shape index: {}]
  %s1 = inlined_call_operand.hbm [shape: f32[128,128], index: 1, kind: input, shape index: {}]
  %s2 = inlined_call_operand.hbm [shape: f32[1,128], index: 2, kind: input, shape index: {}]
  %s3 = inlined_call_operand.hbm [shape: f32[128,128], index: 3, kind: input, shape index: {}]
  %s4 = inlined_call_operand.hbm [shape: f32[1,128], index: 4, kind: input, shape index: {}]
  %s5 = inlined_call_operand.hbm [shape: f32[128,128], index: 5, kind: input, shape index: {}]
  %s6 = inlined_call_operand.hbm [shape: f32[1,128], index: 6, kind: input, shape index: {}]
  %s7 = inlined_call_operand.hbm [shape: f32[128,128], index: 7, kind: input, shape index: {}]
  %s8 = inlined_call_operand.hbm [shape: f32[1,128], index: 8, kind: input, shape index: {}]
  %s9 = inlined_call_operand.hbm [shape: f32[128,128], index: 9, kind: input, shape index: {}]
  %s10 = inlined_call_operand.hbm [shape: f32[1,128], index: 10, kind: input, shape index: {}]
  %s11 = inlined_call_operand.hbm [shape: f32[8,128], index: 11, kind: output, shape index: {0}]
  %s12 = inlined_call_operand.hbm [shape: f32[8,128], index: 12, kind: output, shape index: {1}]
  %13 = xla_tuple %s11, %s12
  %s14 = sld [smem:[#allocation0]]
  $region106: #{tpu_custom_call.1} parent=0
    _
  %s16 = ssub.s32 1, %s14
  %s17 = scalar_select 0, %s16, %s14
  $region1: #{tpu_custom_call.1} parent=0
    #allocation2 [shape = 'u8[4096]{0}', space=vmem, size = 0x1000, scoped, tag = 'input window, operand 0, single buffered']
    #allocation3 [shape = 's32[1]{0}', space=sflag, size = 0x4, scoped, tag = 'scoped memory for tpu_custom_call.1']
    #allocation4 [shape = 's32[1]{0}', space=sflag, size = 0x4, scoped, tag = 'scoped memory for tpu_custom_call.1']
    #allocation5 [shape = 'u8[65536]{0}', space=vmem, size = 0x10000, scoped, tag = 'input window, operand 1, single buffered']
    #allocation6 [shape = 's32[1]{0}', space=sflag, size = 0x4, scoped, tag = 'scoped memory for tpu_custom_call.1']
    #allocation7 [shape = 'u8[512]{0}', space=vmem, size = 0x400, scoped, tag = 'input window, operand 2, single buffered']
    #allocation8 [shape = 'u8[65536]{0}', space=vmem, size = 0x10000, scoped, tag = 'input window, operand 3, single buffered']
    #allocation9 [shape = 's32[1]{0}', space=sflag, size = 0x4, scoped, tag = 'scoped memory for tpu_custom_call.1']
    #allocation10 [shape = 'u8[512]{0}', space=vmem, size = 0x400, scoped, tag = 'input window, operand 4, single buffered']
    #allocation11 [shape = 'u8[65536]{0}', space=vmem, size = 0x10000, scoped, tag = 'input window, operand 5, single buffered']
    #allocation12 [shape = 's32[1]{0}', space=sflag, size = 0x4, scoped, tag = 'scoped memory for tpu_custom_call.1']
    #allocation13 [shape = 'u8[512]{0}', space=vmem, size = 0x400, scoped, tag = 'input window, operand 6, single buffered']
    #allocation14 [shape = 'u8[65536]{0}', space=vmem, size = 0x10000, scoped, tag = 'input window, operand 7, single buffered']
    #allocation15 [shape = 's32[1]{0}', space=sflag, size = 0x4, scoped, tag = 'scoped memory for tpu_custom_call.1']
    #allocation16 [shape = 'u8[512]{0}', space=vmem, size = 0x400, scoped, tag = 'input window, operand 8, single buffered']
    #allocation17 [shape = 'u8[65536]{0}', space=vmem, size = 0x10000, scoped, tag = 'input window, operand 9, single buffered']
    #allocation18 [shape = 's32[1]{0}', space=sflag, size = 0x4, scoped, tag = 'scoped memory for tpu_custom_call.1']
    #allocation19 [shape = 'u8[512]{0}', space=vmem, size = 0x400, scoped, tag = 'input window, operand 10, single buffered']
    #allocation20 [shape = 'u8[4096]{0}', space=vmem, size = 0x1000, scoped, tag = 'output window, operand 0, single buffered']
    #allocation21 [shape = 'u8[4096]{0}', space=vmem, size = 0x1000, scoped, tag = 'output window, operand 1, single buffered']
    #allocation22 [shape = 's32[1]{0}', space=sflag, size = 0x4, scoped, tag = 'scoped memory for tpu_custom_call.1']
    %18 = vsyncpa [#allocation3], 0
    %19 = vsyncpa [#allocation6], 0
    %20 = vsyncpa [#allocation9], 0
    %21 = vsyncpa [#allocation12], 0
    %22 = vsyncpa [#allocation15], 0
    %23 = vsyncpa [#allocation18], 0
    %24 = vsyncpa [#allocation4], 0
    %25 = vsyncpa [#allocation22], 0
    // Predicated region
    $region2: #{tpu_custom_call.1} parent=1 // pred_check
      _
    $region3: #{tpu_custom_call.1} parent=1 // pred_check_branch
      %27 = sbr.rel (0) target = $region5
    $region4: #{tpu_custom_call.1} parent=1 // pred_region
      %s29 = ssub.s32 128, 128
      %30 = vsyncadd [#allocation3], %s29
      %s32 = sshll.u32 [#allocation2], 4
      %s33 = int_to_ptr.vmem [resolvable:$true] %s32
      %35 = dma.hbm_to_vmem [thread:$0]  %s0, 128, %s33, [#allocation3]
    $region5: #{tpu_custom_call.1} parent=1 // pred_fallthru
      _
    // Predicated region
    $region6: #{tpu_custom_call.1} parent=1 // pred_check
      _
    $region7: #{tpu_custom_call.1} parent=1 // pred_check_branch
      %37 = sbr.rel (0) target = $region9
    $region8: #{tpu_custom_call.1} parent=1 // pred_region
      %s39 = ssub.s32 2048, 2048
      %40 = vsyncadd [#allocation6], %s39
      %s41 = sshll.u32 [#allocation5], 4
      %s42 = int_to_ptr.vmem [resolvable:$true] %s41
      %47 = dma.hbm_to_vmem [thread:$0]  %s1, 2048, %s42, [#allocation6], 128, 128, 8
    $region9: #{tpu_custom_call.1} parent=1 // pred_fallthru
      _
    // Predicated region
    $region10: #{tpu_custom_call.1} parent=1 // pred_check
      _
    $region11: #{tpu_custom_call.1} parent=1 // pred_check_branch
      %49 = sbr.rel (0) target = $region13
    $region12: #{tpu_custom_call.1} parent=1 // pred_region
      %s51 = ssub.s32 16, 16
      %52 = vsyncadd [#allocation6], %s51
      %s54 = sshll.u32 [#allocation7], 4
      %s55 = int_to_ptr.vmem [resolvable:$true] %s54
      %57 = dma.hbm_to_vmem [thread:$0]  %s2, 16, %s55, [#allocation6]
    $region13: #{tpu_custom_call.1} parent=1 // pred_fallthru
      _
    // Predicated region
    $region14: #{tpu_custom_call.1} parent=1 // pred_check
      _
    $region15: #{tpu_custom_call.1} parent=1 // pred_check_branch
      %59 = sbr.rel (0) target = $region17
    $region16: #{tpu_custom_call.1} parent=1 // pred_region
      %s61 = ssub.s32 2048, 2048
      %62 = vsyncadd [#allocation9], %s61
      %s63 = sshll.u32 [#allocation8], 4
      %s64 = int_to_ptr.vmem [resolvable:$true] %s63
      %69 = dma.hbm_to_vmem [thread:$0]  %s3, 2048, %s64, [#allocation9], 128, 128, 8
    $region17: #{tpu_custom_call.1} parent=1 // pred_fallthru
      _
    // Predicated region
    $region18: #{tpu_custom_call.1} parent=1 // pred_check
      _
    $region19: #{tpu_custom_call.1} parent=1 // pred_check_branch
      %71 = sbr.rel (0) target = $region21
    $region20: #{tpu_custom_call.1} parent=1 // pred_region
      %s73 = ssub.s32 16, 16
      %74 = vsyncadd [#allocation9], %s73
      %s76 = sshll.u32 [#allocation10], 4
      %s77 = int_to_ptr.vmem [resolvable:$true] %s76
      %79 = dma.hbm_to_vmem [thread:$0]  %s4, 16, %s77, [#allocation9]
    $region21: #{tpu_custom_call.1} parent=1 // pred_fallthru
      _
    // Predicated region
    $region22: #{tpu_custom_call.1} parent=1 // pred_check
      _
    $region23: #{tpu_custom_call.1} parent=1 // pred_check_branch
      %81 = sbr.rel (0) target = $region25
    $region24: #{tpu_custom_call.1} parent=1 // pred_region
      %s83 = ssub.s32 2048, 2048
      %84 = vsyncadd [#allocation12], %s83
      %s85 = sshll.u32 [#allocation11], 4
      %s86 = int_to_ptr.vmem [resolvable:$true] %s85
      %91 = dma.hbm_to_vmem [thread:$0]  %s5, 2048, %s86, [#allocation12], 128, 128, 8
    $region25: #{tpu_custom_call.1} parent=1 // pred_fallthru
      _
    // Predicated region
    $region26: #{tpu_custom_call.1} parent=1 // pred_check
      _
    $region27: #{tpu_custom_call.1} parent=1 // pred_check_branch
      %93 = sbr.rel (0) target = $region29
    $region28: #{tpu_custom_call.1} parent=1 // pred_region
      %s95 = ssub.s32 16, 16
      %96 = vsyncadd [#allocation12], %s95
      %s98 = sshll.u32 [#allocation13], 4
      %s99 = int_to_ptr.vmem [resolvable:$true] %s98
      %101 = dma.hbm_to_vmem [thread:$0]  %s6, 16, %s99, [#allocation12]
    $region29: #{tpu_custom_call.1} parent=1 // pred_fallthru
      _
    // Predicated region
    $region30: #{tpu_custom_call.1} parent=1 // pred_check
      _
    $region31: #{tpu_custom_call.1} parent=1 // pred_check_branch
      %103 = sbr.rel (0) target = $region33
    $region32: #{tpu_custom_call.1} parent=1 // pred_region
      %s105 = ssub.s32 2048, 2048
      %106 = vsyncadd [#allocation15], %s105
      %s107 = sshll.u32 [#allocation14], 4
      %s108 = int_to_ptr.vmem [resolvable:$true] %s107
      %113 = dma.hbm_to_vmem [thread:$0]  %s7, 2048, %s108, [#allocation15], 128, 128, 8
    $region33: #{tpu_custom_call.1} parent=1 // pred_fallthru
      _
    // Predicated region
    $region34: #{tpu_custom_call.1} parent=1 // pred_check
      _
    $region35: #{tpu_custom_call.1} parent=1 // pred_check_branch
      %115 = sbr.rel (0) target = $region37
    $region36: #{tpu_custom_call.1} parent=1 // pred_region
      %s117 = ssub.s32 16, 16
      %118 = vsyncadd [#allocation15], %s117
      %s120 = sshll.u32 [#allocation16], 4
      %s121 = int_to_ptr.vmem [resolvable:$true] %s120
      %123 = dma.hbm_to_vmem [thread:$0]  %s8, 16, %s121, [#allocation15]
    $region37: #{tpu_custom_call.1} parent=1 // pred_fallthru
      _
    // Predicated region
    $region38: #{tpu_custom_call.1} parent=1 // pred_check
      _
    $region39: #{tpu_custom_call.1} parent=1 // pred_check_branch
      %125 = sbr.rel (0) target = $region41
    $region40: #{tpu_custom_call.1} parent=1 // pred_region
      %s127 = ssub.s32 2048, 2048
      %128 = vsyncadd [#allocation18], %s127
      %s129 = sshll.u32 [#allocation17], 4
      %s130 = int_to_ptr.vmem [resolvable:$true] %s129
      %135 = dma.hbm_to_vmem [thread:$0]  %s9, 2048, %s130, [#allocation18], 128, 128, 8
    $region41: #{tpu_custom_call.1} parent=1 // pred_fallthru
      _
    // Predicated region
    $region42: #{tpu_custom_call.1} parent=1 // pred_check
      _
    $region43: #{tpu_custom_call.1} parent=1 // pred_check_branch
      %137 = sbr.rel (0) target = $region45
    $region44: #{tpu_custom_call.1} parent=1 // pred_region
      %s139 = ssub.s32 16, 16
      %140 = vsyncadd [#allocation18], %s139
      %s142 = sshll.u32 [#allocation19], 4
      %s143 = int_to_ptr.vmem [resolvable:$true] %s142
      %145 = dma.hbm_to_vmem [thread:$0]  %s10, 16, %s143, [#allocation18]
    $region45: #{tpu_custom_call.1} parent=1 // pred_fallthru
      _
    // Predicated region
    $region46: #{tpu_custom_call.1} parent=1 // pred_check
      _
    $region47: #{tpu_custom_call.1} parent=1 // pred_check_branch
      %147 = sbr.rel (0) target = $region49
    $region48: #{tpu_custom_call.1} parent=1 // pred_region
      %148 = dma.done [#allocation3], 128
    $region49: #{tpu_custom_call.1} parent=1 // pred_fallthru
      _
    // Predicated region
    $region50: #{tpu_custom_call.1} parent=1 // pred_check
      _
    $region51: #{tpu_custom_call.1} parent=1 // pred_check_branch
      %150 = sbr.rel (0) target = $region53
    $region52: #{tpu_custom_call.1} parent=1 // pred_region
      %151 = dma.done [#allocation6], 2048
    $region53: #{tpu_custom_call.1} parent=1 // pred_fallthru
      _
    // Predicated region
    $region54: #{tpu_custom_call.1} parent=1 // pred_check
      _
    $region55: #{tpu_custom_call.1} parent=1 // pred_check_branch
      %153 = sbr.rel (0) target = $region57
    $region56: #{tpu_custom_call.1} parent=1 // pred_region
      %154 = dma.done [#allocation6], 16
    $region57: #{tpu_custom_call.1} parent=1 // pred_fallthru
      _
    // Predicated region
    $region58: #{tpu_custom_call.1} parent=1 // pred_check
      _
    $region59: #{tpu_custom_call.1} parent=1 // pred_check_branch
      %156 = sbr.rel (0) target = $region61
    $region60: #{tpu_custom_call.1} parent=1 // pred_region
      %157 = dma.done [#allocation9], 2048
    $region61: #{tpu_custom_call.1} parent=1 // pred_fallthru
      _
    // Predicated region
    $region62: #{tpu_custom_call.1} parent=1 // pred_check
      _
    $region63: #{tpu_custom_call.1} parent=1 // pred_check_branch
      %159 = sbr.rel (0) target = $region65
    $region64: #{tpu_custom_call.1} parent=1 // pred_region
      %160 = dma.done [#allocation9], 16
    $region65: #{tpu_custom_call.1} parent=1 // pred_fallthru
      _
    // Predicated region
    $region66: #{tpu_custom_call.1} parent=1 // pred_check
      _
    $region67: #{tpu_custom_call.1} parent=1 // pred_check_branch
      %162 = sbr.rel (0) target = $region69
    $region68: #{tpu_custom_call.1} parent=1 // pred_region
      %163 = dma.done [#allocation12], 2048
    $region69: #{tpu_custom_call.1} parent=1 // pred_fallthru
      _
    // Predicated region
    $region70: #{tpu_custom_call.1} parent=1 // pred_check
      _
    $region71: #{tpu_custom_call.1} parent=1 // pred_check_branch
      %165 = sbr.rel (0) target = $region73
    $region72: #{tpu_custom_call.1} parent=1 // pred_region
      %166 = dma.done [#allocation12], 16
    $region73: #{tpu_custom_call.1} parent=1 // pred_fallthru
      _
    // Predicated region
    $region74: #{tpu_custom_call.1} parent=1 // pred_check
      _
    $region75: #{tpu_custom_call.1} parent=1 // pred_check_branch
      %168 = sbr.rel (0) target = $region77
    $region76: #{tpu_custom_call.1} parent=1 // pred_region
      %169 = dma.done [#allocation15], 2048
    $region77: #{tpu_custom_call.1} parent=1 // pred_fallthru
      _
    // Predicated region
    $region78: #{tpu_custom_call.1} parent=1 // pred_check
      _
    $region79: #{tpu_custom_call.1} parent=1 // pred_check_branch
      %171 = sbr.rel (0) target = $region81
    $region80: #{tpu_custom_call.1} parent=1 // pred_region
      %172 = dma.done [#allocation15], 16
    $region81: #{tpu_custom_call.1} parent=1 // pred_fallthru
      _
    // Predicated region
    $region82: #{tpu_custom_call.1} parent=1 // pred_check
      _
    $region83: #{tpu_custom_call.1} parent=1 // pred_check_branch
      %174 = sbr.rel (0) target = $region85
    $region84: #{tpu_custom_call.1} parent=1 // pred_region
      %175 = dma.done [#allocation18], 2048
    $region85: #{tpu_custom_call.1} parent=1 // pred_fallthru
      _
    // Predicated region
    $region86: #{tpu_custom_call.1} parent=1 // pred_check
      _
    $region87: #{tpu_custom_call.1} parent=1 // pred_check_branch
      %177 = sbr.rel (0) target = $region89
    $region88: #{tpu_custom_call.1} parent=1 // pred_region
      %178 = dma.done [#allocation18], 16
    $region89: #{tpu_custom_call.1} parent=1 // pred_fallthru
      _
    %v179 = vld [vmem:[#allocation2] sm:$0xff]
    %v180 = vld [vmem:[#allocation5] sm:$0xff]
    %v181 = vld [vmem:[#allocation5 + $0x8] sm:$0xff]
    %v182 = vld [vmem:[#allocation5 + $0x10] sm:$0xff]
    %v183 = vld [vmem:[#allocation5 + $0x18] sm:$0xff]
    %v184 = vld [vmem:[#allocation5 + $0x20] sm:$0xff]
    %v185 = vld [vmem:[#allocation5 + $0x28] sm:$0xff]
    %v186 = vld [vmem:[#allocation5 + $0x30] sm:$0xff]
    %v187 = vld [vmem:[#allocation5 + $0x38] sm:$0xff]
    %v188 = vld [vmem:[#allocation5 + $0x40] sm:$0xff]
    %v189 = vld [vmem:[#allocation5 + $0x48] sm:$0xff]
    %v190 = vld [vmem:[#allocation5 + $0x50] sm:$0xff]
    %v191 = vld [vmem:[#allocation5 + $0x58] sm:$0xff]
    %v192 = vld [vmem:[#allocation5 + $0x60] sm:$0xff]
    %v193 = vld [vmem:[#allocation5 + $0x68] sm:$0xff]
    %v194 = vld [vmem:[#allocation5 + $0x70] sm:$0xff]
    %v195 = vld [vmem:[#allocation5 + $0x78] sm:$0xff]
    %v196 = vld [vmem:[#allocation7] sm:$0x1]
    %v198 = vlaneseq
    %v199 = vshrl.u32 %v198, 7
    %v200 = vsub.s32 0, %v199
    %v201 = vrot.slane %v196, %v200
    %203 = vmatprep.subr.mxu0 0.0
    %204 = vmatpush1.msra.mxu0 %v180
    %205 = vmatprep.subr.mxu0 0.0
    %206 = vmatpush1.msra.mxu0 %v181
    %207 = vmatprep.subr.mxu0 0.0
    %208 = vmatpush1.msra.mxu0 %v182
    %209 = vmatprep.subr.mxu0 0.0
    %210 = vmatpush1.msra.mxu0 %v183
    %211 = vmatprep.subr.mxu0 0.0
    %212 = vmatpush1.msra.mxu0 %v184
    %213 = vmatprep.subr.mxu0 0.0
    %214 = vmatpush1.msra.mxu0 %v185
    %215 = vmatprep.subr.mxu0 0.0
    %216 = vmatpush1.msra.mxu0 %v186
    %217 = vmatprep.subr.mxu0 0.0
    %218 = vmatpush1.msra.mxu0 %v187
    %219 = vmatprep.subr.mxu0 0.0
    %220 = vmatpush1.msra.mxu0 %v188
    %221 = vmatprep.subr.mxu0 0.0
    %222 = vmatpush1.msra.mxu0 %v189
    %223 = vmatprep.subr.mxu0 0.0
    %224 = vmatpush1.msra.mxu0 %v190
    %225 = vmatprep.subr.mxu0 0.0
    %226 = vmatpush1.msra.mxu0 %v191
    %227 = vmatprep.subr.mxu0 0.0
    %228 = vmatpush1.msra.mxu0 %v192
    %229 = vmatprep.subr.mxu0 0.0
    %230 = vmatpush1.msra.mxu0 %v193
    %231 = vmatprep.subr.mxu0 0.0
    %232 = vmatpush1.msra.mxu0 %v194
    %233 = vmatprep.subr.mxu0 0.0
    %234 = vmatpush1.msra.mxu0 %v195
    %235 = vmatprep.subr.mxu0 0.0
    %236 = vmatpush1.msra.mxu0 0.0
    %237 = vmatprep.subr.mxu0 0.0
    %238 = vmatpush1.msra.mxu0 0.0
    %239 = vmatprep.subr.mxu0 0.0
    %240 = vmatpush1.msra.mxu0 0.0
    %241 = vmatprep.subr.mxu0 0.0
    %242 = vmatpush1.msra.mxu0 0.0
    %243 = vmatprep.subr.mxu0 0.0
    %244 = vmatpush1.msra.mxu0 0.0
    %245 = vmatprep.subr.mxu0 0.0
    %246 = vmatpush1.msra.mxu0 0.0
    %247 = vmatprep.subr.mxu0 0.0
    %248 = vmatpush1.msra.mxu0 0.0
    %249 = vmatprep.subr.mxu0 0.0
    %250 = vmatpush1.msra.mxu0 0.0
    %251 = vmatprep.subr.mxu0 0.0
    %252 = vmatpush1.msra.mxu0 0.0
    %253 = vmatprep.subr.mxu0 0.0
    %254 = vmatpush1.msra.mxu0 0.0
    %255 = vmatprep.subr.mxu0 0.0
    %256 = vmatpush1.msra.mxu0 0.0
    %257 = vmatprep.subr.mxu0 0.0
    %258 = vmatpush1.msra.mxu0 0.0
    %259 = vmatprep.subr.mxu0 0.0
    %260 = vmatpush1.msra.mxu0 0.0
    %261 = vmatprep.subr.mxu0 0.0
    %262 = vmatpush1.msra.mxu0 0.0
    %263 = vmatprep.subr.mxu0 0.0
    %264 = vmatpush1.msra.mxu0 0.0
    %265 = vmatprep.subr.mxu0 0.0
    %266 = vmatpush1.msra.mxu0 0.0
    %267 = vmatprep.mubr.f32.mxu0 0.0
    %268 = vmatmul.mubr.f32.gmra.mrb[0].mxu0 %v179
    %v269 = vpop.f32.mrb[0].mxu0
    %v270 = vadd.f32 %v201, %v269
    %v271 = vpop.f32.mrb[0].mxu0
    %272 = vdwg.mxu0
    %v273 = vmax.f32 %v270, 0.0
    %v274 = vld [vmem:[#allocation8] sm:$0xff]
    %v275 = vld [vmem:[#allocation8 + $0x8] sm:$0xff]
    %v276 = vld [vmem:[#allocation8 + $0x10] sm:$0xff]
    %v277 = vld [vmem:[#allocation8 + $0x18] sm:$0xff]
    %v278 = vld [vmem:[#allocation8 + $0x20] sm:$0xff]
    %v279 = vld [vmem:[#allocation8 + $0x28] sm:$0xff]
    %v280 = vld [vmem:[#allocation8 + $0x30] sm:$0xff]
    %v281 = vld [vmem:[#allocation8 + $0x38] sm:$0xff]
    %v282 = vld [vmem:[#allocation8 + $0x40] sm:$0xff]
    %v283 = vld [vmem:[#allocation8 + $0x48] sm:$0xff]
    %v284 = vld [vmem:[#allocation8 + $0x50] sm:$0xff]
    %v285 = vld [vmem:[#allocation8 + $0x58] sm:$0xff]
    %v286 = vld [vmem:[#allocation8 + $0x60] sm:$0xff]
    %v287 = vld [vmem:[#allocation8 + $0x68] sm:$0xff]
    %v288 = vld [vmem:[#allocation8 + $0x70] sm:$0xff]
    %v289 = vld [vmem:[#allocation8 + $0x78] sm:$0xff]
    %v290 = vld [vmem:[#allocation10] sm:$0x1]
    %v292 = vlaneseq
    %v293 = vshrl.u32 %v292, 7
    %v294 = vsub.s32 0, %v293
    %v295 = vrot.slane %v290, %v294
    %297 = vmatprep.subr.mxu0 0.0
    %298 = vmatpush1.msra.mxu0 %v274
    %299 = vmatprep.subr.mxu0 0.0
    %300 = vmatpush1.msra.mxu0 %v275
    %301 = vmatprep.subr.mxu0 0.0
    %302 = vmatpush1.msra.mxu0 %v276
    %303 = vmatprep.subr.mxu0 0.0
    %304 = vmatpush1.msra.mxu0 %v277
    %305 = vmatprep.subr.mxu0 0.0
    %306 = vmatpush1.msra.mxu0 %v278
    %307 = vmatprep.subr.mxu0 0.0
    %308 = vmatpush1.msra.mxu0 %v279
    %309 = vmatprep.subr.mxu0 0.0
    %310 = vmatpush1.msra.mxu0 %v280
    %311 = vmatprep.subr.mxu0 0.0
    %312 = vmatpush1.msra.mxu0 %v281
    %313 = vmatprep.subr.mxu0 0.0
    %314 = vmatpush1.msra.mxu0 %v282
    %315 = vmatprep.subr.mxu0 0.0
    %316 = vmatpush1.msra.mxu0 %v283
    %317 = vmatprep.subr.mxu0 0.0
    %318 = vmatpush1.msra.mxu0 %v284
    %319 = vmatprep.subr.mxu0 0.0
    %320 = vmatpush1.msra.mxu0 %v285
    %321 = vmatprep.subr.mxu0 0.0
    %322 = vmatpush1.msra.mxu0 %v286
    %323 = vmatprep.subr.mxu0 0.0
    %324 = vmatpush1.msra.mxu0 %v287
    %325 = vmatprep.subr.mxu0 0.0
    %326 = vmatpush1.msra.mxu0 %v288
    %327 = vmatprep.subr.mxu0 0.0
    %328 = vmatpush1.msra.mxu0 %v289
    %329 = vmatprep.subr.mxu0 0.0
    %330 = vmatpush1.msra.mxu0 0.0
    %331 = vmatprep.subr.mxu0 0.0
    %332 = vmatpush1.msra.mxu0 0.0
    %333 = vmatprep.subr.mxu0 0.0
    %334 = vmatpush1.msra.mxu0 0.0
    %335 = vmatprep.subr.mxu0 0.0
    %336 = vmatpush1.msra.mxu0 0.0
    %337 = vmatprep.subr.mxu0 0.0
    %338 = vmatpush1.msra.mxu0 0.0
    %339 = vmatprep.subr.mxu0 0.0
    %340 = vmatpush1.msra.mxu0 0.0
    %341 = vmatprep.subr.mxu0 0.0
    %342 = vmatpush1.msra.mxu0 0.0
    %343 = vmatprep.subr.mxu0 0.0
    %344 = vmatpush1.msra.mxu0 0.0
    %345 = vmatprep.subr.mxu0 0.0
    %346 = vmatpush1.msra.mxu0 0.0
    %347 = vmatprep.subr.mxu0 0.0
    %348 = vmatpush1.msra.mxu0 0.0
    %349 = vmatprep.subr.mxu0 0.0
    %350 = vmatpush1.msra.mxu0 0.0
    %351 = vmatprep.subr.mxu0 0.0
    %352 = vmatpush1.msra.mxu0 0.0
    %353 = vmatprep.subr.mxu0 0.0
    %354 = vmatpush1.msra.mxu0 0.0
    %355 = vmatprep.subr.mxu0 0.0
    %356 = vmatpush1.msra.mxu0 0.0
    %357 = vmatprep.subr.mxu0 0.0
    %358 = vmatpush1.msra.mxu0 0.0
    %359 = vmatprep.subr.mxu0 0.0
    %360 = vmatpush1.msra.mxu0 0.0
    %361 = vmatprep.mubr.f32.mxu0 0.0
    %362 = vmatmul.mubr.f32.gmra.mrb[0].mxu0 %v273
    %v363 = vpop.f32.mrb[0].mxu0
    %v364 = vadd.f32 %v295, %v363
    %v365 = vpop.f32.mrb[0].mxu0
    %366 = vdwg.mxu0
    %v367 = vmax.f32 %v364, 0.0
    %v368 = vld [vmem:[#allocation11] sm:$0xff]
    %v369 = vld [vmem:[#allocation11 + $0x8] sm:$0xff]
    %v370 = vld [vmem:[#allocation11 + $0x10] sm:$0xff]
    %v371 = vld [vmem:[#allocation11 + $0x18] sm:$0xff]
    %v372 = vld [vmem:[#allocation11 + $0x20] sm:$0xff]
    %v373 = vld [vmem:[#allocation11 + $0x28] sm:$0xff]
    %v374 = vld [vmem:[#allocation11 + $0x30] sm:$0xff]
    %v375 = vld [vmem:[#allocation11 + $0x38] sm:$0xff]
    %v376 = vld [vmem:[#allocation11 + $0x40] sm:$0xff]
    %v377 = vld [vmem:[#allocation11 + $0x48] sm:$0xff]
    %v378 = vld [vmem:[#allocation11 + $0x50] sm:$0xff]
    %v379 = vld [vmem:[#allocation11 + $0x58] sm:$0xff]
    %v380 = vld [vmem:[#allocation11 + $0x60] sm:$0xff]
    %v381 = vld [vmem:[#allocation11 + $0x68] sm:$0xff]
    %v382 = vld [vmem:[#allocation11 + $0x70] sm:$0xff]
    %v383 = vld [vmem:[#allocation11 + $0x78] sm:$0xff]
    %v384 = vld [vmem:[#allocation13] sm:$0x1]
    %v386 = vlaneseq
    %v387 = vshrl.u32 %v386, 7
    %v388 = vsub.s32 0, %v387
    %v389 = vrot.slane %v384, %v388
    %391 = vmatprep.subr.mxu0 0.0
    %392 = vmatpush1.msra.mxu0 %v368
    %393 = vmatprep.subr.mxu0 0.0
    %394 = vmatpush1.msra.mxu0 %v369
    %395 = vmatprep.subr.mxu0 0.0
    %396 = vmatpush1.msra.mxu0 %v370
    %397 = vmatprep.subr.mxu0 0.0
    %398 = vmatpush1.msra.mxu0 %v371
    %399 = vmatprep.subr.mxu0 0.0
    %400 = vmatpush1.msra.mxu0 %v372
    %401 = vmatprep.subr.mxu0 0.0
    %402 = vmatpush1.msra.mxu0 %v373
    %403 = vmatprep.subr.mxu0 0.0
    %404 = vmatpush1.msra.mxu0 %v374
    %405 = vmatprep.subr.mxu0 0.0
    %406 = vmatpush1.msra.mxu0 %v375
    %407 = vmatprep.subr.mxu0 0.0
    %408 = vmatpush1.msra.mxu0 %v376
    %409 = vmatprep.subr.mxu0 0.0
    %410 = vmatpush1.msra.mxu0 %v377
    %411 = vmatprep.subr.mxu0 0.0
    %412 = vmatpush1.msra.mxu0 %v378
    %413 = vmatprep.subr.mxu0 0.0
    %414 = vmatpush1.msra.mxu0 %v379
    %415 = vmatprep.subr.mxu0 0.0
    %416 = vmatpush1.msra.mxu0 %v380
    %417 = vmatprep.subr.mxu0 0.0
    %418 = vmatpush1.msra.mxu0 %v381
    %419 = vmatprep.subr.mxu0 0.0
    %420 = vmatpush1.msra.mxu0 %v382
    %421 = vmatprep.subr.mxu0 0.0
    %422 = vmatpush1.msra.mxu0 %v383
    %423 = vmatprep.subr.mxu0 0.0
    %424 = vmatpush1.msra.mxu0 0.0
    %425 = vmatprep.subr.mxu0 0.0
    %426 = vmatpush1.msra.mxu0 0.0
    %427 = vmatprep.subr.mxu0 0.0
    %428 = vmatpush1.msra.mxu0 0.0
    %429 = vmatprep.subr.mxu0 0.0
    %430 = vmatpush1.msra.mxu0 0.0
    %431 = vmatprep.subr.mxu0 0.0
    %432 = vmatpush1.msra.mxu0 0.0
    %433 = vmatprep.subr.mxu0 0.0
    %434 = vmatpush1.msra.mxu0 0.0
    %435 = vmatprep.subr.mxu0 0.0
    %436 = vmatpush1.msra.mxu0 0.0
    %437 = vmatprep.subr.mxu0 0.0
    %438 = vmatpush1.msra.mxu0 0.0
    %439 = vmatprep.subr.mxu0 0.0
    %440 = vmatpush1.msra.mxu0 0.0
    %441 = vmatprep.subr.mxu0 0.0
    %442 = vmatpush1.msra.mxu0 0.0
    %443 = vmatprep.subr.mxu0 0.0
    %444 = vmatpush1.msra.mxu0 0.0
    %445 = vmatprep.subr.mxu0 0.0
    %446 = vmatpush1.msra.mxu0 0.0
    %447 = vmatprep.subr.mxu0 0.0
    %448 = vmatpush1.msra.mxu0 0.0
    %449 = vmatprep.subr.mxu0 0.0
    %450 = vmatpush1.msra.mxu0 0.0
    %451 = vmatprep.subr.mxu0 0.0
    %452 = vmatpush1.msra.mxu0 0.0
    %453 = vmatprep.subr.mxu0 0.0
    %454 = vmatpush1.msra.mxu0 0.0
    %455 = vmatprep.mubr.f32.mxu0 0.0
    %456 = vmatmul.mubr.f32.gmra.mrb[0].mxu0 %v367
    %v457 = vpop.f32.mrb[0].mxu0
    %v458 = vadd.f32 %v389, %v457
    %v459 = vpop.f32.mrb[0].mxu0
    %460 = vdwg.mxu0
    %v461 = vld [vmem:[#allocation14] sm:$0xff]
    %v462 = vld [vmem:[#allocation14 + $0x8] sm:$0xff]
    %v463 = vld [vmem:[#allocation14 + $0x10] sm:$0xff]
    %v464 = vld [vmem:[#allocation14 + $0x18] sm:$0xff]
    %v465 = vld [vmem:[#allocation14 + $0x20] sm:$0xff]
    %v466 = vld [vmem:[#allocation14 + $0x28] sm:$0xff]
    %v467 = vld [vmem:[#allocation14 + $0x30] sm:$0xff]
    %v468 = vld [vmem:[#allocation14 + $0x38] sm:$0xff]
    %v469 = vld [vmem:[#allocation14 + $0x40] sm:$0xff]
    %v470 = vld [vmem:[#allocation14 + $0x48] sm:$0xff]
    %v471 = vld [vmem:[#allocation14 + $0x50] sm:$0xff]
    %v472 = vld [vmem:[#allocation14 + $0x58] sm:$0xff]
    %v473 = vld [vmem:[#allocation14 + $0x60] sm:$0xff]
    %v474 = vld [vmem:[#allocation14 + $0x68] sm:$0xff]
    %v475 = vld [vmem:[#allocation14 + $0x70] sm:$0xff]
    %v476 = vld [vmem:[#allocation14 + $0x78] sm:$0xff]
    %v477 = vld [vmem:[#allocation16] sm:$0x1]
    %v479 = vlaneseq
    %v480 = vshrl.u32 %v479, 7
    %v481 = vsub.s32 0, %v480
    %v482 = vrot.slane %v477, %v481
    %484 = vmatprep.subr.mxu0 0.0
    %485 = vmatpush1.msra.mxu0 %v461
    %486 = vmatprep.subr.mxu0 0.0
    %487 = vmatpush1.msra.mxu0 %v462
    %488 = vmatprep.subr.mxu0 0.0
    %489 = vmatpush1.msra.mxu0 %v463
    %490 = vmatprep.subr.mxu0 0.0
    %491 = vmatpush1.msra.mxu0 %v464
    %492 = vmatprep.subr.mxu0 0.0
    %493 = vmatpush1.msra.mxu0 %v465
    %494 = vmatprep.subr.mxu0 0.0
    %495 = vmatpush1.msra.mxu0 %v466
    %496 = vmatprep.subr.mxu0 0.0
    %497 = vmatpush1.msra.mxu0 %v467
    %498 = vmatprep.subr.mxu0 0.0
    %499 = vmatpush1.msra.mxu0 %v468
    %500 = vmatprep.subr.mxu0 0.0
    %501 = vmatpush1.msra.mxu0 %v469
    %502 = vmatprep.subr.mxu0 0.0
    %503 = vmatpush1.msra.mxu0 %v470
    %504 = vmatprep.subr.mxu0 0.0
    %505 = vmatpush1.msra.mxu0 %v471
    %506 = vmatprep.subr.mxu0 0.0
    %507 = vmatpush1.msra.mxu0 %v472
    %508 = vmatprep.subr.mxu0 0.0
    %509 = vmatpush1.msra.mxu0 %v473
    %510 = vmatprep.subr.mxu0 0.0
    %511 = vmatpush1.msra.mxu0 %v474
    %512 = vmatprep.subr.mxu0 0.0
    %513 = vmatpush1.msra.mxu0 %v475
    %514 = vmatprep.subr.mxu0 0.0
    %515 = vmatpush1.msra.mxu0 %v476
    %516 = vmatprep.subr.mxu0 0.0
    %517 = vmatpush1.msra.mxu0 0.0
    %518 = vmatprep.subr.mxu0 0.0
    %519 = vmatpush1.msra.mxu0 0.0
    %520 = vmatprep.subr.mxu0 0.0
    %521 = vmatpush1.msra.mxu0 0.0
    %522 = vmatprep.subr.mxu0 0.0
    %523 = vmatpush1.msra.mxu0 0.0
    %524 = vmatprep.subr.mxu0 0.0
    %525 = vmatpush1.msra.mxu0 0.0
    %526 = vmatprep.subr.mxu0 0.0
    %527 = vmatpush1.msra.mxu0 0.0
    %528 = vmatprep.subr.mxu0 0.0
    %529 = vmatpush1.msra.mxu0 0.0
    %530 = vmatprep.subr.mxu0 0.0
    %531 = vmatpush1.msra.mxu0 0.0
    %532 = vmatprep.subr.mxu0 0.0
    %533 = vmatpush1.msra.mxu0 0.0
    %534 = vmatprep.subr.mxu0 0.0
    %535 = vmatpush1.msra.mxu0 0.0
    %536 = vmatprep.subr.mxu0 0.0
    %537 = vmatpush1.msra.mxu0 0.0
    %538 = vmatprep.subr.mxu0 0.0
    %539 = vmatpush1.msra.mxu0 0.0
    %540 = vmatprep.subr.mxu0 0.0
    %541 = vmatpush1.msra.mxu0 0.0
    %542 = vmatprep.subr.mxu0 0.0
    %543 = vmatpush1.msra.mxu0 0.0
    %544 = vmatprep.subr.mxu0 0.0
    %545 = vmatpush1.msra.mxu0 0.0
    %546 = vmatprep.subr.mxu0 0.0
    %547 = vmatpush1.msra.mxu0 0.0
    %548 = vmatprep.mubr.f32.mxu0 0.0
    %549 = vmatmul.mubr.f32.gmra.mrb[0].mxu0 %v273
    %v550 = vpop.f32.mrb[0].mxu0
    %v551 = vadd.f32 %v482, %v550
    %v552 = vpop.f32.mrb[0].mxu0
    %553 = vdwg.mxu0
    %v554 = vmax.f32 %v551, 0.0
    %v555 = vld [vmem:[#allocation17] sm:$0xff]
    %v556 = vld [vmem:[#allocation17 + $0x8] sm:$0xff]
    %v557 = vld [vmem:[#allocation17 + $0x10] sm:$0xff]
    %v558 = vld [vmem:[#allocation17 + $0x18] sm:$0xff]
    %v559 = vld [vmem:[#allocation17 + $0x20] sm:$0xff]
    %v560 = vld [vmem:[#allocation17 + $0x28] sm:$0xff]
    %v561 = vld [vmem:[#allocation17 + $0x30] sm:$0xff]
    %v562 = vld [vmem:[#allocation17 + $0x38] sm:$0xff]
    %v563 = vld [vmem:[#allocation17 + $0x40] sm:$0xff]
    %v564 = vld [vmem:[#allocation17 + $0x48] sm:$0xff]
    %v565 = vld [vmem:[#allocation17 + $0x50] sm:$0xff]
    %v566 = vld [vmem:[#allocation17 + $0x58] sm:$0xff]
    %v567 = vld [vmem:[#allocation17 + $0x60] sm:$0xff]
    %v568 = vld [vmem:[#allocation17 + $0x68] sm:$0xff]
    %v569 = vld [vmem:[#allocation17 + $0x70] sm:$0xff]
    %v570 = vld [vmem:[#allocation17 + $0x78] sm:$0xff]
    %v571 = vld [vmem:[#allocation19] sm:$0x1]
    %v573 = vlaneseq
    %v574 = vshrl.u32 %v573, 7
    %v575 = vsub.s32 0, %v574
    %v576 = vrot.slane %v571, %v575
    %578 = vmatprep.subr.mxu0 0.0
    %579 = vmatpush1.msra.mxu0 %v555
    %580 = vmatprep.subr.mxu0 0.0
    %581 = vmatpush1.msra.mxu0 %v556
    %582 = vmatprep.subr.mxu0 0.0
    %583 = vmatpush1.msra.mxu0 %v557
    %584 = vmatprep.subr.mxu0 0.0
    %585 = vmatpush1.msra.mxu0 %v558
    %586 = vmatprep.subr.mxu0 0.0
    %587 = vmatpush1.msra.mxu0 %v559
    %588 = vmatprep.subr.mxu0 0.0
    %589 = vmatpush1.msra.mxu0 %v560
    %590 = vmatprep.subr.mxu0 0.0
    %591 = vmatpush1.msra.mxu0 %v561
    %592 = vmatprep.subr.mxu0 0.0
    %593 = vmatpush1.msra.mxu0 %v562
    %594 = vmatprep.subr.mxu0 0.0
    %595 = vmatpush1.msra.mxu0 %v563
    %596 = vmatprep.subr.mxu0 0.0
    %597 = vmatpush1.msra.mxu0 %v564
    %598 = vmatprep.subr.mxu0 0.0
    %599 = vmatpush1.msra.mxu0 %v565
    %600 = vmatprep.subr.mxu0 0.0
    %601 = vmatpush1.msra.mxu0 %v566
    %602 = vmatprep.subr.mxu0 0.0
    %603 = vmatpush1.msra.mxu0 %v567
    %604 = vmatprep.subr.mxu0 0.0
    %605 = vmatpush1.msra.mxu0 %v568
    %606 = vmatprep.subr.mxu0 0.0
    %607 = vmatpush1.msra.mxu0 %v569
    %608 = vmatprep.subr.mxu0 0.0
    %609 = vmatpush1.msra.mxu0 %v570
    %610 = vmatprep.subr.mxu0 0.0
    %611 = vmatpush1.msra.mxu0 0.0
    %612 = vmatprep.subr.mxu0 0.0
    %613 = vmatpush1.msra.mxu0 0.0
    %614 = vmatprep.subr.mxu0 0.0
    %615 = vmatpush1.msra.mxu0 0.0
    %616 = vmatprep.subr.mxu0 0.0
    %617 = vmatpush1.msra.mxu0 0.0
    %618 = vmatprep.subr.mxu0 0.0
    %619 = vmatpush1.msra.mxu0 0.0
    %620 = vmatprep.subr.mxu0 0.0
    %621 = vmatpush1.msra.mxu0 0.0
    %622 = vmatprep.subr.mxu0 0.0
    %623 = vmatpush1.msra.mxu0 0.0
    %624 = vmatprep.subr.mxu0 0.0
    %625 = vmatpush1.msra.mxu0 0.0
    %626 = vmatprep.subr.mxu0 0.0
    %627 = vmatpush1.msra.mxu0 0.0
    %628 = vmatprep.subr.mxu0 0.0
    %629 = vmatpush1.msra.mxu0 0.0
    %630 = vmatprep.subr.mxu0 0.0
    %631 = vmatpush1.msra.mxu0 0.0
    %632 = vmatprep.subr.mxu0 0.0
    %633 = vmatpush1.msra.mxu0 0.0
    %634 = vmatprep.subr.mxu0 0.0
    %635 = vmatpush1.msra.mxu0 0.0
    %636 = vmatprep.subr.mxu0 0.0
    %637 = vmatpush1.msra.mxu0 0.0
    %638 = vmatprep.subr.mxu0 0.0
    %639 = vmatpush1.msra.mxu0 0.0
    %640 = vmatprep.subr.mxu0 0.0
    %641 = vmatpush1.msra.mxu0 0.0
    %642 = vmatprep.mubr.f32.mxu0 0.0
    %643 = vmatmul.mubr.f32.gmra.mrb[0].mxu0 %v554
    %v644 = vpop.f32.mrb[0].mxu0
    %v645 = vadd.f32 %v576, %v644
    %v646 = vpop.f32.mrb[0].mxu0
    %647 = vdwg.mxu0
    %648 = vst [vmem:[#allocation20] sm:$0xff] %v458
    %649 = vst [vmem:[#allocation21] sm:$0xff] %v645
    // Predicated region
    $region90: #{tpu_custom_call.1} parent=1 // pred_check
      _
    $region91: #{tpu_custom_call.1} parent=1 // pred_check_branch
      %651 = sbr.rel (0) target = $region93
    $region92: #{tpu_custom_call.1} parent=1 // pred_region
      %s653 = ssub.s32 128, 128
      %654 = vsyncadd [#allocation4], %s653
      %s656 = sshll.u32 [#allocation20], 4
      %s657 = int_to_ptr.vmem [resolvable:$true] %s656
      %659 = dma.vmem_to_hbm [thread:$0]  %s657, 128, %s11, [#allocation4]
    $region93: #{tpu_custom_call.1} parent=1 // pred_fallthru
      _
    // Predicated region
    $region94: #{tpu_custom_call.1} parent=1 // pred_check
      _
    $region95: #{tpu_custom_call.1} parent=1 // pred_check_branch
      %661 = sbr.rel (0) target = $region97
    $region96: #{tpu_custom_call.1} parent=1 // pred_region
      %s663 = ssub.s32 128, 128
      %664 = vsyncadd [#allocation22], %s663
      %s666 = sshll.u32 [#allocation21], 4
      %s667 = int_to_ptr.vmem [resolvable:$true] %s666
      %669 = dma.vmem_to_hbm [thread:$0]  %s667, 128, %s12, [#allocation22]
    $region97: #{tpu_custom_call.1} parent=1 // pred_fallthru
      _
    // Predicated region
    $region98: #{tpu_custom_call.1} parent=1 // pred_check
      _
    $region99: #{tpu_custom_call.1} parent=1 // pred_check_branch
      %671 = sbr.rel (0) target = $region101
    $region100: #{tpu_custom_call.1} parent=1 // pred_region
      %672 = dma.done [#allocation4], 128
    $region101: #{tpu_custom_call.1} parent=1 // pred_fallthru
      _
    // Predicated region
    $region102: #{tpu_custom_call.1} parent=1 // pred_check
      _
    $region103: #{tpu_custom_call.1} parent=1 // pred_check_branch
      %674 = sbr.rel (0) target = $region105
    $region104: #{tpu_custom_call.1} parent=1 // pred_region
      %675 = dma.done [#allocation22], 128
    $region105: #{tpu_custom_call.1} parent=1 // pred_fallthru
      _
    %676 = vsyncpa [#allocation3], 1
    %677 = vsyncpa [#allocation6], 1
    %678 = vsyncpa [#allocation9], 1
    %679 = vsyncpa [#allocation12], 1
    %680 = vsyncpa [#allocation15], 1
    %681 = vsyncpa [#allocation18], 1
    %682 = vsyncpa [#allocation4], 1
    %683 = vsyncpa [#allocation22], 1

</llo_original>
